<compile_context>
chip_gen: v7x
topology: tpu7x:2x2x1
jax: 0.10.0
libtpu: 0.0.40
codegen_flags: <defaults>
</compile_context>

<pallas_src>
import jax
import jax.numpy as jnp
from jax.experimental import pallas as pl
from jax.experimental.pallas import tpu as pltpu

FRAME_KEY = "frames"

_LANE = 128                               # TPU lane width
_MAX_LANE_COLS = 2048                     # cap for the lane-dense last dim
_TARGET_BLOCK_BYTES = 2 * 1024 * 1024     # ~2 MiB/block -> ~8 MiB VMEM w/ dbl-buffered in+out
_KERNEL_MIN_BYTES = 1 * 1024 * 1024       # below this the kernel is pure overhead
_VMEM_LIMIT_BYTES = 32 * 1024 * 1024      # fits v7x (64 MiB physical / 32 MiB default scoped)


def _identity_aug_kernel(x_ref, o_ref):
    # TODO(synk): concrete augmentation math goes here in subclasses; the base
    # class applies no transform.
    o_ref[...] = x_ref[...]


def _choose_cols(total_elems: int):
    """Largest multiple of 128 (<= _MAX_LANE_COLS) dividing the element count."""
    c = _MAX_LANE_COLS
    while c >= _LANE:
        if total_elems % c == 0:
            return c
        c -= _LANE
    return None


def _choose_tile_rows(rows: int, cols: int, itemsize: int) -> int:
    """Row-tile: multiple of the dtype's min sublane tile, divides `rows`,
    targets ~_TARGET_BLOCK_BYTES per block.  Falls back to the full array."""
    sub = max(8, 32 // max(1, itemsize))  # f32 -> 8, bf16 -> 16, int8 -> 32
    if rows % sub != 0:
        return rows  # full-array block is always layout-legal
    cap = max(sub, (_TARGET_BLOCK_BYTES // (cols * itemsize)) // sub * sub)
    t = min(rows, cap)
    while t >= sub:
        if rows % t == 0:
            return t
        t -= sub
    return rows


def _run_identity_copy(x2d: jax.Array, tile_rows: int) -> jax.Array:
    rows, cols = x2d.shape
    grid = (rows // tile_rows,)
    return pl.pallas_call(
        _identity_aug_kernel,
        out_shape=jax.ShapeDtypeStruct((rows, cols), x2d.dtype),
        grid_spec=pltpu.PrefetchScalarGridSpec(
            num_scalar_prefetch=0,
            grid=grid,
            in_specs=[pl.BlockSpec((tile_rows, cols), lambda i: (i, 0))],
            out_specs=pl.BlockSpec((tile_rows, cols), lambda i: (i, 0)),
        ),
        compiler_params=pltpu.CompilerParams(
            dimension_semantics=("parallel",),       # embarrassingly parallel copy
            vmem_limit_bytes=_VMEM_LIMIT_BYTES,
        ),
    )(x2d)


def base_aug_forward(frames: jax.Array, force_kernel: bool = False) -> jax.Array:
    """BaseAug semantics: no transform.

    Small tensors are returned as-is (zero HBM traffic).  Larger tensors (or
    force_kernel=True) flow through the row-tiled, lane-dense Pallas template.
    """
    total = frames.size
    itemsize = frames.dtype.itemsize
    if not force_kernel and total * itemsize < _KERNEL_MIN_BYTES:
        # Identity base class: just hand the buffer back.
        return frames

    cols = _choose_cols(total)
    if cols is None:
        # Element count not a multiple of 128: single whole-array block
        # (block dims equal the full array dims, so layout is legal).
        # TODO(synk): pad to a 128-multiple for very large odd-sized tensors.
        x2d = frames.reshape(-1, frames.shape[-1])
        out2d = _run_identity_copy(x2d, x2d.shape[0])
        return out2d.reshape(frames.shape)

    rows = total // cols
    x2d = frames.reshape(rows, cols)
    tile_rows = _choose_tile_rows(rows, cols, itemsize)
    out2d = _run_identity_copy(x2d, tile_rows)
    return out2d.reshape(frames.shape)


class BaseAugJAX:
    """Mirror of the PyTorch BaseAug: holds target_keys; the base forward is
    the (identity) no-op applied to each target tensor."""

    def __init__(self, target_keys=None):
        self.target_keys = target_keys if target_keys is not None else [FRAME_KEY]

    def forward(self, batch):
        out = dict(batch)
        for key in self.target_keys:
            out[key] = base_aug_forward(batch[key])
        return out

    __call__ = forward


if __name__ == "__main__":
    key = jax.random.PRNGKey(0)
    k1, k2 = jax.random.split(key)

    # Small NCHW shape consistent with the module: batch=2, channels=4, 16x16.
    frames_small = jax.random.normal(k1, (2, 4, 16, 16), dtype=jnp.float32)

    # 1) Module-level forward: tiny tensor -> zero-copy passthrough.
    aug = BaseAugJAX()
    out_small = jax.block_until_ready(aug({FRAME_KEY: frames_small})[FRAME_KEY])
    assert out_small.shape == frames_small.shape
    assert out_small.dtype == frames_small.dtype
    assert bool(jnp.array_equal(out_small, frames_small))

    # 2) Force the Pallas kernel path on the small shape (full-array block).
    out_k = jax.block_until_ready(base_aug_forward(frames_small, force_kernel=True))
    assert bool(jnp.array_equal(out_k, frames_small))

    # 3) Exercise the tiled, multi-step kernel path on a modest 4 MiB tensor
    #    (lane-dense (512, 2048) view, 256-row / 2 MiB tiles -> 2 grid steps).
    frames_big = jax.random.normal(k2, (8, 4, 128, 256), dtype=jnp.float32)
    out_big = jax.block_until_ready(base_aug_forward(frames_big))
    assert out_big.shape == frames_big.shape
    assert bool(jnp.array_equal(out_big, frames_big))

    print("KERNEL_OK")
</pallas_src>

<mosaic_0001>
module attributes {stable_mosaic.version = 11 : i64} {
  func.func @_identity_aug_kernel(%arg0: i32, %arg1: memref<1x2048xf32, #tpu.memory_space<vmem>>, %arg2: memref<1x2048xf32, #tpu.memory_space<vmem>>) attributes {dimension_semantics = [#tpu.dimension_semantics<parallel>], iteration_bounds = array<i64: 1>, scalar_prefetch = 0 : i64, scratch_operands = 0 : i64, tpu.core_type = #tpu.core_type<tc>, window_params = [{transform_indices = @transform_0, window_bounds = array<i64: 1, 2048>}, {transform_indices = @transform_1, window_bounds = array<i64: 1, 2048>}]} {
    %c0 = arith.constant 0 : index
    %c0_0 = arith.constant 0 : index
    %0 = vector.load %arg1[%c0, %c0_0] : memref<1x2048xf32, #tpu.memory_space<vmem>>, vector<1x2048xf32>
    %c0_1 = arith.constant 0 : index
    %c0_2 = arith.constant 0 : index
    %1 = vector.load %arg2[%c0_1, %c0_2] : memref<1x2048xf32, #tpu.memory_space<vmem>>, vector<1x2048xf32>
    tpu.vector_store %arg2[%c0_1, %c0_2], %0 {strides = array<i32>} : memref<1x2048xf32, #tpu.memory_space<vmem>>, vector<1x2048xf32>,
    return
  }
  func.func @transform_0(%arg0: i32) -> (i32, i32) {
    %c0_i32 = arith.constant 0 : i32
    %c0_i32_0 = arith.constant 0 : i32
    return %arg0, %c0_i32 : i32, i32
  }
  func.func @transform_1(%arg0: i32) -> (i32, i32) {
    %c0_i32 = arith.constant 0 : i32
    %c0_i32_0 = arith.constant 0 : i32
    return %arg0, %c0_i32 : i32, i32
  }
}

</mosaic_0001>

<llo_original>
// kernel: tpu_custom_call.1
$region0: #{tpu_custom_call.1}
  #allocation0 [shape = 'u32[]', space=smem, size = 0x4, offset = 0x4, fixed_abs, tag = 'smem constant byte address 0x4 - core index']
  #allocation1 [shape = 'u32[144,128]{1,0:T(1,128)}', space=vmem, size = 0x12000, scoped, tag = 'internal scratch']
  %s0 = inlined_call_operand.hbm [shape: f32[1,2048], index: 0, kind: input, shape index: {}]
  %s1 = inlined_call_operand.hbm [shape: f32[1,2048], index: 1, kind: output, shape index: {}]
  %s2 = sld [smem:[#allocation0]]
  $region18: #{tpu_custom_call.1} parent=0
    _
  %s4 = ssub.s32 1, %s2
  %s5 = scalar_select 0, %s4, %s2
  $region1: #{tpu_custom_call.1} parent=0
    #allocation2 [shape = 'u8[8192]{0}', space=vmem, size = 0x2000, scoped, tag = 'input window, operand 0, single buffered']
    #allocation3 [shape = 's32[1]{0}', space=sflag, size = 0x4, scoped, tag = 'scoped memory for tpu_custom_call.1']
    #allocation4 [shape = 's32[1]{0}', space=sflag, size = 0x4, scoped, tag = 'scoped memory for tpu_custom_call.1']
    #allocation5 [shape = 'u8[8192]{0}', space=vmem, size = 0x2000, scoped, tag = 'output window, operand 0, single buffered']
    %6 = vsyncpa [#allocation3], 0
    %7 = vsyncpa [#allocation4], 0
    // Predicated region
    $region2: #{tpu_custom_call.1} parent=1 // pred_check
      _
    $region3: #{tpu_custom_call.1} parent=1 // pred_check_branch
      %9 = sbr.rel (0) target = $region5
    $region4: #{tpu_custom_call.1} parent=1 // pred_region
      %s11 = ssub.s32 256, 256
      %12 = vsyncadd [#allocation3], %s11
      %s14 = sshll.u32 [#allocation2], 4
      %s15 = int_to_ptr.vmem [resolvable:$true] %s14
      %17 = dma.hbm_to_vmem [thread:$0]  %s0, 256, %s15, [#allocation3]
    $region5: #{tpu_custom_call.1} parent=1 // pred_fallthru
      _
    // Predicated region
    $region6: #{tpu_custom_call.1} parent=1 // pred_check
      _
    $region7: #{tpu_custom_call.1} parent=1 // pred_check_branch
      %19 = sbr.rel (0) target = $region9
    $region8: #{tpu_custom_call.1} parent=1 // pred_region
      %20 = dma.done [#allocation3], 256
    $region9: #{tpu_custom_call.1} parent=1 // pred_fallthru
      _
    %v21 = vld [vmem:[#allocation2] sm:$0xff]
    %v22 = vld [vmem:[#allocation2 + $0x8] sm:$0xff]
    %23 = vst [vmem:[#allocation5] sm:$0xff] %v21
    %24 = vst [vmem:[#allocation5 + $0x8] sm:$0xff] %v22
    // Predicated region
    $region10: #{tpu_custom_call.1} parent=1 // pred_check
      _
    $region11: #{tpu_custom_call.1} parent=1 // pred_check_branch
      %26 = sbr.rel (0) target = $region13
    $region12: #{tpu_custom_call.1} parent=1 // pred_region
      %s28 = ssub.s32 256, 256
      %29 = vsyncadd [#allocation4], %s28
      %s31 = sshll.u32 [#allocation5], 4
      %s32 = int_to_ptr.vmem [resolvable:$true] %s31
      %34 = dma.vmem_to_hbm [thread:$0]  %s32, 256, %s1, [#allocation4]
    $region13: #{tpu_custom_call.1} parent=1 // pred_fallthru
      _
    // Predicated region
    $region14: #{tpu_custom_call.1} parent=1 // pred_check
      _
    $region15: #{tpu_custom_call.1} parent=1 // pred_check_branch
      %36 = sbr.rel (0) target = $region17
    $region16: #{tpu_custom_call.1} parent=1 // pred_region
      %37 = dma.done [#allocation4], 256
    $region17: #{tpu_custom_call.1} parent=1 // pred_fallthru
      _
    %38 = vsyncpa [#allocation3], 1
    %39 = vsyncpa [#allocation4], 1

</llo_original>
